<compile_context>
chip_gen: v5e
topology: v5e:2x2
jax: 0.10.0
libtpu: 0.0.40
codegen_flags: <defaults>
</compile_context>

<pallas_src>
import functools

import jax
import jax.numpy as jnp
from jax import lax
from jax.experimental import pallas as pl
from jax.experimental.pallas import tpu as pltpu

LANES = 128            # TPU lane width (last dim)
SUBLANES = 8           # f32 sublane tile
CHUNK_ROWS = 512       # rows per inner-loop step (64 vregs/value -> small code)
MAX_BLOCK_ROWS = 8192  # rows per grid step -> 4 MiB per f32 input per step


def _cdiv(a, b):
    return (a + b - 1) // b


def _tensorcores_per_chip():
    """TensorCores per chip: 2 on v7x-class parts, else 1.

    Unknown / undetectable -> 1, which is always correct (just no core split)."""
    try:
        kind = jax.devices()[0].device_kind.lower()
    except Exception:  # pragma: no cover - defensive
        return 1
    return 2 if "v7" in kind else 1


def _dice_bce_kernel(x_ref, t_ref, inter_ref, sum_ref, bce_ref, *,
                     blocks_per_core, block_rows, chunk_rows, rows_valid,
                     emit_masked, hard_targets):
    c = pl.program_id(0)            # core-split axis (CORE_PARALLEL on v7x)
    k = pl.program_id(1)            # row-block walk ("arbitrary" reduction)
    blk = c * blocks_per_core + k   # unclamped logical block id
    n_chunks = block_rows // chunk_rows

    @pl.when(k == 0)
    def _init():
        inter_ref[...] = jnp.zeros_like(inter_ref)
        sum_ref[...] = jnp.zeros_like(sum_ref)
        bce_ref[...] = jnp.zeros_like(bce_ref)

    def _fold(v):
        # (R,128) -> (R//8, 8, 128) -> sum over leading axis: pure vreg adds.
        return jnp.sum(v.reshape(-1, SUBLANES, LANES), axis=0)

    def _process(x, t, row_start, masked):
        x = x.astype(jnp.float32)
        t = t.astype(jnp.float32)
        if masked:
            # Row mask only (invalid data is always whole trailing rows):
            # build it from a (rows, 1) iota and let the select broadcast.
            rid = row_start + lax.broadcasted_iota(jnp.int32, (x.shape[0], 1), 0)
            valid = rid < rows_valid
            x = jnp.where(valid, x, 0.0)
            t = jnp.where(valid, t, 0.0)
        if hard_targets:
            # t in {0,1}: single log (EUP) instead of two.
            bce = jnp.maximum(jnp.log(jnp.where(t > 0.5, x, 1.0 - x)), -100.0)
        else:
            # F.binary_cross_entropy semantics: log() clamped to >= -100.
            log_x = jnp.maximum(jnp.log(x), -100.0)
            log_1mx = jnp.maximum(jnp.log(1.0 - x), -100.0)
            # Element contribution (negated once in the wrapper):
            #   log(1-x) + t * (log(x) - log(1-x))
            bce = log_1mx + t * (log_x - log_1mx)
        return _fold(x * t), _fold(x + t), _fold(bce)

    def _run(masked):
        base = blk * block_rows     # absolute first row of this block
        if n_chunks == 1:
            d_i, d_s, d_b = _process(x_ref[...], t_ref[...], base, masked)
        else:
            def body(j, carry):
                a_i, a_s, a_b = carry
                r0 = pl.multiple_of(j * chunk_rows, chunk_rows)
                d_i, d_s, d_b = _process(
                    x_ref[pl.ds(r0, chunk_rows), :],
                    t_ref[pl.ds(r0, chunk_rows), :],
                    base + r0, masked)
                return a_i + d_i, a_s + d_s, a_b + d_b

            zero = jnp.zeros((SUBLANES, LANES), jnp.float32)
            d_i, d_s, d_b = lax.fori_loop(0, n_chunks, body, (zero, zero, zero))
        inter_ref[...] += d_i
        sum_ref[...] += d_s
        bce_ref[...] += d_b

    if emit_masked:
        # Only the partial tail block and phantom (clamped) blocks can contain
        # rows >= rows_valid; everything else takes the unmasked fast path.
        has_oob = (blk + 1) * block_rows > rows_valid

        @pl.when(has_oob)
        def _masked():
            _run(True)

        @pl.when(jnp.logical_not(has_oob))
        def _fast():
            _run(False)
    else:
        _run(False)


def _partial_sums(x2, t2, num_cores, hard_targets):
    """Run the kernel on a (rows, 128) view; returns 3 partial-sum arrays."""
    rows = x2.shape[0]
    if rows <= CHUNK_ROWS:
        block_rows = rows          # full-extent block: always legal, 1 chunk
        chunk_rows = rows
    else:
        block_rows = min(MAX_BLOCK_ROWS, (rows // CHUNK_ROWS) * CHUNK_ROWS)
        chunk_rows = CHUNK_ROWS
    assert block_rows % chunk_rows == 0

    total_blocks = _cdiv(rows, block_rows)
    num_cores = max(1, min(int(num_cores), total_blocks))
    blocks_per_core = _cdiv(total_blocks, num_cores)
    # Masking only needed if there is a partial tail block or phantom blocks.
    emit_masked = (num_cores * blocks_per_core * block_rows != rows)

    kernel = functools.partial(
        _dice_bce_kernel,
        blocks_per_core=blocks_per_core,
        block_rows=block_rows,
        chunk_rows=chunk_rows,
        rows_valid=rows,
        emit_masked=emit_masked,
        hard_targets=hard_targets,
    )

    def in_map(c, k):
        blk = c * blocks_per_core + k
        return (jnp.minimum(blk, total_blocks - 1), 0)   # clamp phantom blocks

    def out_map(c, k):
        return (c, 0)

    part = jax.ShapeDtypeStruct((num_cores * SUBLANES, LANES), jnp.float32)
    if num_cores > 1:
        dims = (pltpu.CORE_PARALLEL, pltpu.ARBITRARY)    # real 2-TC split (v7x)
    else:
        dims = (pltpu.ARBITRARY, pltpu.ARBITRARY)        # single-core walk

    return pl.pallas_call(
        kernel,
        out_shape=(part, part, part),
        grid_spec=pltpu.PrefetchScalarGridSpec(
            num_scalar_prefetch=0,
            grid=(num_cores, blocks_per_core),
            in_specs=[
                pl.BlockSpec((block_rows, LANES), in_map),
                pl.BlockSpec((block_rows, LANES), in_map),
            ],
            out_specs=[
                pl.BlockSpec((SUBLANES, LANES), out_map),
                pl.BlockSpec((SUBLANES, LANES), out_map),
                pl.BlockSpec((SUBLANES, LANES), out_map),
            ],
        ),
        compiler_params=pltpu.CompilerParams(
            dimension_semantics=dims,
            vmem_limit_bytes=48 * 1024 * 1024,  # <= 64 MiB physical on v7x
        ),
    )(x2, t2)


def dice_bce_loss(inputs, targets, smooth=1.0, *, num_cores=None,
                  assume_hard_targets=False):
    """Pallas equivalent of DiceBCELoss.forward(inputs, targets, smooth).

    `inputs`/`targets` may be any float (or for targets, int/bool) dtype; they
    travel to the kernel in their native dtype and are cast to f32 after load,
    so narrow wire dtypes directly cut HBM traffic.
    """
    n = inputs.size
    x = inputs.reshape(-1)   # native dtype on the wire
    t = targets.reshape(-1)

    tile = SUBLANES * LANES                 # 1024-element f32 tile
    n_main = (n // tile) * tile             # kernel handles this exact prefix
    rows = n_main // LANES                  # multiple of 8
    rem = n - n_main                        # < 1024 leftovers -> plain JAX

    inter = jnp.float32(0.0)
    sum_xt = jnp.float32(0.0)
    bce_sum = jnp.float32(0.0)

    if rows > 0:
        if rem:
            # Ragged total: kernel consumes the contiguous tile-aligned prefix
            # (no full-array zero-pad copy); the tiny remainder is added below.
            xm = lax.slice(x, (0,), (n_main,))
            tm = lax.slice(t, (0,), (n_main,))
        else:
            xm, tm = x, t                   # pure bitcast path, zero copies
        x2 = xm.reshape(rows, LANES)
        t2 = tm.reshape(rows, LANES)

        nc = _tensorcores_per_chip() if num_cores is None else int(num_cores)
        try:
            inter_p, sum_p, bce_p = _partial_sums(x2, t2, nc, assume_hard_targets)
        except Exception:                   # pragma: no cover - safety fallback
            if nc <= 1:
                raise
            inter_p, sum_p, bce_p = _partial_sums(x2, t2, 1, assume_hard_targets)

        # Tiny final reductions on (num_cores*8, 128) partials.
        inter = jnp.sum(inter_p)
        sum_xt = jnp.sum(sum_p)
        bce_sum = jnp.sum(bce_p)

    if rem:
        xr = x[n_main:].astype(jnp.float32)
        tr = t[n_main:].astype(jnp.float32)
        inter = inter + jnp.sum(xr * tr)
        sum_xt = sum_xt + jnp.sum(xr) + jnp.sum(tr)
        if assume_hard_targets:
            b = jnp.maximum(jnp.log(jnp.where(tr > 0.5, xr, 1.0 - xr)), -100.0)
        else:
            lx = jnp.maximum(jnp.log(xr), -100.0)
            l1x = jnp.maximum(jnp.log(1.0 - xr), -100.0)
            b = l1x + tr * (lx - l1x)
        bce_sum = bce_sum + jnp.sum(b)

    dice_loss = 1.0 - (2.0 * inter + smooth) / (sum_xt + smooth)
    bce_mean = -bce_sum / n
    return bce_mean + dice_loss


def _reference(inputs, targets, smooth=1.0):
    x = inputs.reshape(-1).astype(jnp.float32)
    t = targets.reshape(-1).astype(jnp.float32)
    inter = jnp.sum(x * t)
    dice = 1.0 - (2.0 * inter + smooth) / (jnp.sum(x) + jnp.sum(t) + smooth)
    log_x = jnp.maximum(jnp.log(x), -100.0)
    log_1mx = jnp.maximum(jnp.log(1.0 - x), -100.0)
    bce = -jnp.mean(t * log_x + (1.0 - t) * log_1mx)
    return bce + dice


if __name__ == "__main__":
    key = jax.random.PRNGKey(0)
    k1, k2, k3, k4, k5, k6, k7, k8 = jax.random.split(key, 8)

    def check(loss, inputs, targets, name):
        loss = jax.block_until_ready(loss)
        ref = _reference(inputs, targets)
        assert jnp.allclose(loss, ref, rtol=1e-5, atol=1e-5), (name, loss, ref)

    # Main case: NCHW batch=2, channels=4, H=W=16 (2048 elements, f32 probs).
    shape = (2, 4, 16, 16)
    x0 = jax.nn.sigmoid(jax.random.normal(k1, shape, dtype=jnp.float32))
    t0 = (jax.random.uniform(k2, shape) > 0.5).astype(jnp.float32)
    check(dice_bce_loss(x0, t0, smooth=1.0), x0, t0, "base")

    # Same data: hard-target fast path (single log) and narrow bf16 targets.
    check(dice_bce_loss(x0, t0, assume_hard_targets=True), x0, t0, "hard")
    check(dice_bce_loss(x0, t0.astype(jnp.bfloat16)), x0, t0, "bf16-targets")

    # Ragged element count (n % 1024 != 0) with soft targets: prefix-kernel
    # plus plain-JAX remainder (no zero-pad copy).
    shape_r = (3, 5, 16, 17)
    xr = jax.nn.sigmoid(jax.random.normal(k3, shape_r, dtype=jnp.float32))
    tr = jax.random.uniform(k4, shape_r, dtype=jnp.float32)
    check(dice_bce_loss(xr, tr), xr, tr, "ragged")

    # Multi-chunk block: exercises the inner fori_loop path.
    shape_c = (2, 4, 128, 128)
    xc = jax.nn.sigmoid(jax.random.normal(k5, shape_c, dtype=jnp.float32))
    tc = (jax.random.uniform(k6, shape_c) > 0.5).astype(jnp.float32)
    check(dice_bce_loss(xc, tc), xc, tc, "chunked")

    # Partial tail block: exercises both the masked and unmasked pl.when paths.
    shape_m = (5, 13, 32, 32)
    xm = jax.nn.sigmoid(jax.random.normal(k7, shape_m, dtype=jnp.float32))
    tm = (jax.random.uniform(k8, shape_m) > 0.5).astype(jnp.float32)
    check(dice_bce_loss(xm, tm), xm, tm, "masked-tail")

    print("KERNEL_OK")
</pallas_src>

<mosaic_0001>
module attributes {stable_mosaic.version = 11 : i64} {
  func.func @_dice_bce_kernel(%arg0: i32, %arg1: i32, %arg2: memref<16x128xf32, #tpu.memory_space<vmem>>, %arg3: memref<16x128xf32, #tpu.memory_space<vmem>>, %arg4: memref<8x128xf32, #tpu.memory_space<vmem>>, %arg5: memref<8x128xf32, #tpu.memory_space<vmem>>, %arg6: memref<8x128xf32, #tpu.memory_space<vmem>>) attributes {dimension_semantics = [#tpu.dimension_semantics<arbitrary>, #tpu.dimension_semantics<arbitrary>], iteration_bounds = array<i64: 1, 1>, scalar_prefetch = 0 : i64, scratch_operands = 0 : i64, tpu.core_type = #tpu.core_type<tc>, window_params = [{transform_indices = @transform_0, window_bounds = array<i64: 16, 128>}, {transform_indices = @transform_1, window_bounds = array<i64: 16, 128>}, {transform_indices = @transform_2, window_bounds = array<i64: 8, 128>}, {transform_indices = @transform_3, window_bounds = array<i64: 8, 128>}, {transform_indices = @transform_4, window_bounds = array<i64: 8, 128>}]} {
    %c0_i32 = arith.constant 0 : i32
    %0 = arith.cmpi eq, %arg1, %c0_i32 : i32
    %1 = arith.extui %0 : i1 to i32
    %c0_i32_0 = arith.constant 0 : i32
    %2 = arith.cmpi ne, %1, %c0_i32_0 : i32
    scf.if %2 {
      %cst_21 = arith.constant 0.000000e+00 : f32
      %33 = vector.broadcast %cst_21 : f32 to vector<8x128xf32>
      %c0_22 = arith.constant 0 : index
      %c0_23 = arith.constant 0 : index
      %34 = vector.load %arg4[%c0_22, %c0_23] : memref<8x128xf32, #tpu.memory_space<vmem>>, vector<8x128xf32>
      tpu.vector_store %arg4[%c0_22, %c0_23], %33 {strides = array<i32>} : memref<8x128xf32, #tpu.memory_space<vmem>>, vector<8x128xf32>,
      %cst_24 = arith.constant 0.000000e+00 : f32
      %35 = vector.broadcast %cst_24 : f32 to vector<8x128xf32>
      %c0_25 = arith.constant 0 : index
      %c0_26 = arith.constant 0 : index
      %36 = vector.load %arg5[%c0_25, %c0_26] : memref<8x128xf32, #tpu.memory_space<vmem>>, vector<8x128xf32>
      tpu.vector_store %arg5[%c0_25, %c0_26], %35 {strides = array<i32>} : memref<8x128xf32, #tpu.memory_space<vmem>>, vector<8x128xf32>,
      %cst_27 = arith.constant 0.000000e+00 : f32
      %37 = vector.broadcast %cst_27 : f32 to vector<8x128xf32>
      %c0_28 = arith.constant 0 : index
      %c0_29 = arith.constant 0 : index
      %38 = vector.load %arg6[%c0_28, %c0_29] : memref<8x128xf32, #tpu.memory_space<vmem>>, vector<8x128xf32>
      tpu.vector_store %arg6[%c0_28, %c0_29], %37 {strides = array<i32>} : memref<8x128xf32, #tpu.memory_space<vmem>>, vector<8x128xf32>,
    } else {
    }
    %c0 = arith.constant 0 : index
    %c0_1 = arith.constant 0 : index
    %3 = vector.load %arg2[%c0, %c0_1] : memref<16x128xf32, #tpu.memory_space<vmem>>, vector<16x128xf32>
    %c0_2 = arith.constant 0 : index
    %c0_3 = arith.constant 0 : index
    %4 = vector.load %arg3[%c0_2, %c0_3] : memref<16x128xf32, #tpu.memory_space<vmem>>, vector<16x128xf32>
    %5 = math.log %3 : vector<16x128xf32>
    %cst = arith.constant -1.000000e+02 : f32
    %6 = vector.broadcast %cst : f32 to vector<16x128xf32>
    %7 = arith.maximumf %5, %6 : vector<16x128xf32>
    %cst_4 = arith.constant 1.000000e+00 : f32
    %8 = vector.broadcast %cst_4 : f32 to vector<16x128xf32>
    %9 = arith.subf %8, %3 : vector<16x128xf32>
    %10 = math.log %9 : vector<16x128xf32>
    %cst_5 = arith.constant -1.000000e+02 : f32
    %11 = vector.broadcast %cst_5 : f32 to vector<16x128xf32>
    %12 = arith.maximumf %10, %11 : vector<16x128xf32>
    %13 = arith.subf %7, %12 : vector<16x128xf32>
    %14 = arith.mulf %4, %13 : vector<16x128xf32>
    %15 = arith.addf %12, %14 : vector<16x128xf32>
    %16 = arith.mulf %3, %4 : vector<16x128xf32>
    %17 = vector.shape_cast %16 : vector<16x128xf32> to vector<2x8x128xf32>
    %cst_6 = arith.constant dense<0.000000e+00> : vector<8x128xf32>
    %18 = vector.multi_reduction <add>, %17, %cst_6 [0] : vector<2x8x128xf32> to vector<8x128xf32>
    %19 = arith.addf %3, %4 : vector<16x128xf32>
    %20 = vector.shape_cast %19 : vector<16x128xf32> to vector<2x8x128xf32>
    %cst_7 = arith.constant dense<0.000000e+00> : vector<8x128xf32>
    %21 = vector.multi_reduction <add>, %20, %cst_7 [0] : vector<2x8x128xf32> to vector<8x128xf32>
    %22 = vector.shape_cast %15 : vector<16x128xf32> to vector<2x8x128xf32>
    %cst_8 = arith.constant dense<0.000000e+00> : vector<8x128xf32>
    %23 = vector.multi_reduction <add>, %22, %cst_8 [0] : vector<2x8x128xf32> to vector<8x128xf32>
    %c0_9 = arith.constant 0 : index
    %c0_10 = arith.constant 0 : index
    %24 = vector.load %arg4[%c0_9, %c0_10] : memref<8x128xf32, #tpu.memory_space<vmem>>, vector<8x128xf32>
    %25 = arith.addf %24, %18 : vector<8x128xf32>
    %c0_11 = arith.constant 0 : index
    %c0_12 = arith.constant 0 : index
    %26 = vector.load %arg4[%c0_11, %c0_12] : memref<8x128xf32, #tpu.memory_space<vmem>>, vector<8x128xf32>
    tpu.vector_store %arg4[%c0_11, %c0_12], %25 {strides = array<i32>} : memref<8x128xf32, #tpu.memory_space<vmem>>, vector<8x128xf32>,
    %c0_13 = arith.constant 0 : index
    %c0_14 = arith.constant 0 : index
    %27 = vector.load %arg5[%c0_13, %c0_14] : memref<8x128xf32, #tpu.memory_space<vmem>>, vector<8x128xf32>
    %28 = arith.addf %27, %21 : vector<8x128xf32>
    %c0_15 = arith.constant 0 : index
    %c0_16 = arith.constant 0 : index
    %29 = vector.load %arg5[%c0_15, %c0_16] : memref<8x128xf32, #tpu.memory_space<vmem>>, vector<8x128xf32>
    tpu.vector_store %arg5[%c0_15, %c0_16], %28 {strides = array<i32>} : memref<8x128xf32, #tpu.memory_space<vmem>>, vector<8x128xf32>,
    %c0_17 = arith.constant 0 : index
    %c0_18 = arith.constant 0 : index
    %30 = vector.load %arg6[%c0_17, %c0_18] : memref<8x128xf32, #tpu.memory_space<vmem>>, vector<8x128xf32>
    %31 = arith.addf %30, %23 : vector<8x128xf32>
    %c0_19 = arith.constant 0 : index
    %c0_20 = arith.constant 0 : index
    %32 = vector.load %arg6[%c0_19, %c0_20] : memref<8x128xf32, #tpu.memory_space<vmem>>, vector<8x128xf32>
    tpu.vector_store %arg6[%c0_19, %c0_20], %31 {strides = array<i32>} : memref<8x128xf32, #tpu.memory_space<vmem>>, vector<8x128xf32>,
    return
  }
  func.func @transform_0(%arg0: i32, %arg1: i32) -> (i32, i32) {
    %c1_i32 = arith.constant 1 : i32
    %0 = arith.muli %arg0, %c1_i32 : i32
    %1 = arith.addi %0, %arg1 : i32
    %c0_i32 = arith.constant 0 : i32
    %2 = arith.minsi %1, %c0_i32 : i32
    %c0_i32_0 = arith.constant 0 : i32
    %c0_i32_1 = arith.constant 0 : i32
    return %2, %c0_i32_0 : i32, i32
  }
  func.func @transform_1(%arg0: i32, %arg1: i32) -> (i32, i32) {
    %c1_i32 = arith.constant 1 : i32
    %0 = arith.muli %arg0, %c1_i32 : i32
    %1 = arith.addi %0, %arg1 : i32
    %c0_i32 = arith.constant 0 : i32
    %2 = arith.minsi %1, %c0_i32 : i32
    %c0_i32_0 = arith.constant 0 : i32
    %c0_i32_1 = arith.constant 0 : i32
    return %2, %c0_i32_0 : i32, i32
  }
  func.func @transform_2(%arg0: i32, %arg1: i32) -> (i32, i32) {
    %c0_i32 = arith.constant 0 : i32
    %c0_i32_0 = arith.constant 0 : i32
    return %arg0, %c0_i32 : i32, i32
  }
  func.func @transform_3(%arg0: i32, %arg1: i32) -> (i32, i32) {
    %c0_i32 = arith.constant 0 : i32
    %c0_i32_0 = arith.constant 0 : i32
    return %arg0, %c0_i32 : i32, i32
  }
  func.func @transform_4(%arg0: i32, %arg1: i32) -> (i32, i32) {
    %c0_i32 = arith.constant 0 : i32
    %c0_i32_0 = arith.constant 0 : i32
    return %arg0, %c0_i32 : i32, i32
  }
}

</mosaic_0001>

<llo_original>
// kernel: tpu_custom_call.1
$region0: #{tpu_custom_call.1}
  #allocation0 [shape = 'u32[]', space=smem, size = 0x4, offset = 0x4, fixed_abs, tag = 'smem constant byte address 0x4 - core index']
  #allocation1 [shape = 'u32[72,128]{1,0:T(1,128)}', space=vmem, size = 0x9000, scoped, tag = 'internal scratch']
  %s0 = inlined_call_operand.hbm [shape: f32[16,128], index: 0, kind: input, shape index: {}]
  %s1 = inlined_call_operand.hbm [shape: f32[16,128], index: 1, kind: input, shape index: {}]
  %s2 = inlined_call_operand.hbm [shape: f32[8,128], index: 2, kind: output, shape index: {0}]
  %s3 = inlined_call_operand.hbm [shape: f32[8,128], index: 3, kind: output, shape index: {1}]
  %s4 = inlined_call_operand.hbm [shape: f32[8,128], index: 4, kind: output, shape index: {2}]
  %5 = xla_tuple %s2, %s3, %s4
  %s6 = sld [smem:[#allocation0]]
  $region46: #{tpu_custom_call.1} parent=0
    _
  %s8 = ssub.s32 1, %s6
  %s9 = scalar_select 0, %s8, %s6
  $region1: #{tpu_custom_call.1} parent=0
    #allocation2 [shape = 'u8[8192]{0}', space=vmem, size = 0x2000, scoped, tag = 'input window, operand 0, single buffered']
    #allocation3 [shape = 's32[1]{0}', space=sflag, size = 0x4, scoped, tag = 'scoped memory for tpu_custom_call.1']
    #allocation4 [shape = 's32[1]{0}', space=sflag, size = 0x4, scoped, tag = 'scoped memory for tpu_custom_call.1']
    #allocation5 [shape = 'u8[8192]{0}', space=vmem, size = 0x2000, scoped, tag = 'input window, operand 1, single buffered']
    #allocation6 [shape = 's32[1]{0}', space=sflag, size = 0x4, scoped, tag = 'scoped memory for tpu_custom_call.1']
    #allocation7 [shape = 'u8[4096]{0}', space=vmem, size = 0x1000, scoped, tag = 'output window, operand 0, single buffered']
    #allocation8 [shape = 'u8[4096]{0}', space=vmem, size = 0x1000, scoped, tag = 'output window, operand 1, single buffered']
    #allocation9 [shape = 's32[1]{0}', space=sflag, size = 0x4, scoped, tag = 'scoped memory for tpu_custom_call.1']
    #allocation10 [shape = 'u8[4096]{0}', space=vmem, size = 0x1000, scoped, tag = 'output window, operand 2, single buffered']
    %10 = vsyncpa [#allocation3], 0
    %11 = vsyncpa [#allocation6], 0
    %12 = vsyncpa [#allocation4], 0
    %13 = vsyncpa [#allocation9], 0
    // Predicated region
    $region2: #{tpu_custom_call.1} parent=1 // pred_check
      _
    $region3: #{tpu_custom_call.1} parent=1 // pred_check_branch
      %15 = sbr.rel (0) target = $region5
    $region4: #{tpu_custom_call.1} parent=1 // pred_region
      %s16 = sadd.s32 0, 0
      %p17 = scmp.lt.s32.totalorder %s16, 0
      %s18 = scalar_select %p17, %s16, 0
      %s19 = smul.u32 2, %s18
      %21 = vsyncadd [#allocation3], 0
      %s22 = smul.addr %s19, 8
      %s23 = scalar_lea.hbm %s0, %s22
      %s24 = sshll.u32 %s23, 4
      %s25 = int_to_ptr.hbm [resolvable:$true] %s24
      %s26 = sshll.u32 [#allocation2], 4
      %s27 = int_to_ptr.vmem [resolvable:$true] %s26
      %32 = dma.hbm_to_vmem [thread:$0]  %s25, 256, %s27, [#allocation3], 128, 128, 8
    $region5: #{tpu_custom_call.1} parent=1 // pred_fallthru
      _
    // Predicated region
    $region6: #{tpu_custom_call.1} parent=1 // pred_check
      _
    $region7: #{tpu_custom_call.1} parent=1 // pred_check_branch
      %34 = sbr.rel (0) target = $region9
    $region8: #{tpu_custom_call.1} parent=1 // pred_region
      %s35 = sadd.s32 0, 0
      %p36 = scmp.lt.s32.totalorder %s35, 0
      %s37 = scalar_select %p36, %s35, 0
      %s38 = smul.u32 2, %s37
      %40 = vsyncadd [#allocation6], 0
      %s41 = smul.addr %s38, 8
      %s42 = scalar_lea.hbm %s1, %s41
      %s43 = sshll.u32 %s42, 4
      %s44 = int_to_ptr.hbm [resolvable:$true] %s43
      %s45 = sshll.u32 [#allocation5], 4
      %s46 = int_to_ptr.vmem [resolvable:$true] %s45
      %51 = dma.hbm_to_vmem [thread:$0]  %s44, 256, %s46, [#allocation6], 128, 128, 8
    $region9: #{tpu_custom_call.1} parent=1 // pred_fallthru
      _
    // Predicated region
    $region10: #{tpu_custom_call.1} parent=1 // pred_check
      _
    $region11: #{tpu_custom_call.1} parent=1 // pred_check_branch
      %53 = sbr.rel (0) target = $region13
    $region12: #{tpu_custom_call.1} parent=1 // pred_region
      %55 = dma.done [#allocation3], 256
    $region13: #{tpu_custom_call.1} parent=1 // pred_fallthru
      _
    // Predicated region
    $region14: #{tpu_custom_call.1} parent=1 // pred_check
      _
    $region15: #{tpu_custom_call.1} parent=1 // pred_check_branch
      %57 = sbr.rel (0) target = $region17
    $region16: #{tpu_custom_call.1} parent=1 // pred_region
      %59 = dma.done [#allocation6], 256
    $region17: #{tpu_custom_call.1} parent=1 // pred_fallthru
      _
    %s60 = sadd.s32 0, 0
    %p61 = scmp.lt.s32.totalorder %s60, 0
    %s62 = scalar_select %p61, %s60, 0
    %s63 = smul.u32 2, %s62
    %s64 = sadd.s32 0, 0
    %p65 = scmp.lt.s32.totalorder %s64, 0
    %s66 = scalar_select %p65, %s64, 0
    %s67 = smul.u32 2, %s66
    %p68 = scmp.eq.s32.totalorder 0, 0
    // Predicated region
    $region18: #{tpu_custom_call.1} parent=1 // pred_check
      %p69 = pneg %p68
    $region19: #{tpu_custom_call.1} parent=1 // pred_check_branch
      %71 = sbr.rel (%p69) target = $region21
    $region20: #{tpu_custom_call.1} parent=1 // pred_region
      %72 = vst [vmem:[#allocation7] sm:$0xff] 0.0
      %73 = vst [vmem:[#allocation8] sm:$0xff] 0.0
      %74 = vst [vmem:[#allocation10] sm:$0xff] 0.0
    $region21: #{tpu_custom_call.1} parent=1 // pred_fallthru
      _
    %v75 = vld [vmem:[#allocation2] sm:$0xff]
    %v76 = vld [vmem:[#allocation2 + $0x8] sm:$0xff]
    %v77 = vld [vmem:[#allocation5] sm:$0xff]
    %v78 = vld [vmem:[#allocation5 + $0x8] sm:$0xff]
    %v79 = vlog2.pop %v75
    %v80 = vmul.f32 %v79, 0.6931472
    %v81 = vlog2.pop %v76
    %v82 = vmul.f32 %v81, 0.6931472
    %v83 = vmax.f32 %v80, -100.0
    %v84 = vmax.f32 %v82, -100.0
    %v85 = vsub.f32 1.0, %v75
    %v86 = vsub.f32 1.0, %v76
    %v87 = vlog2.pop %v85
    %v88 = vmul.f32 %v87, 0.6931472
    %v89 = vlog2.pop %v86
    %v90 = vmul.f32 %v89, 0.6931472
    %v91 = vmax.f32 %v88, -100.0
    %v92 = vmax.f32 %v90, -100.0
    %v93 = vsub.f32 %v83, %v91
    %v94 = vsub.f32 %v84, %v92
    %v95 = vmul.f32 %v77, %v93
    %v96 = vmul.f32 %v78, %v94
    %v97 = vadd.f32 %v91, %v95
    %v98 = vadd.f32 %v92, %v96
    %v99 = vmul.f32 %v75, %v77
    %v100 = vmul.f32 %v76, %v78
    %v101 = vadd.f32 %v99, %v100
    %v102 = vadd.f32 %v75, %v77
    %v103 = vadd.f32 %v76, %v78
    %v104 = vadd.f32 %v102, %v103
    %v105 = vadd.f32 %v97, %v98
    %v106 = vld [vmem:[#allocation7] sm:$0xff]
    %v107 = vadd.f32 %v106, %v101
    %108 = vst [vmem:[#allocation7] sm:$0xff] %v107
    %v109 = vld [vmem:[#allocation8] sm:$0xff]
    %v110 = vadd.f32 %v109, %v104
    %111 = vst [vmem:[#allocation8] sm:$0xff] %v110
    %v112 = vld [vmem:[#allocation10] sm:$0xff]
    %v113 = vadd.f32 %v112, %v105
    %114 = vst [vmem:[#allocation10] sm:$0xff] %v113
    // Predicated region
    $region22: #{tpu_custom_call.1} parent=1 // pred_check
      _
    $region23: #{tpu_custom_call.1} parent=1 // pred_check_branch
      %116 = sbr.rel (0) target = $region25
    $region24: #{tpu_custom_call.1} parent=1 // pred_region
      %118 = vsyncadd [#allocation4], 0
      %s120 = sshll.u32 [#allocation7], 4
      %s121 = int_to_ptr.vmem [resolvable:$true] %s120
      %s122 = sshll.u32 %s2, 4
      %s123 = int_to_ptr.hbm [resolvable:$true] %s122
      %125 = dma.vmem_to_hbm [thread:$0]  %s121, 128, %s123, [#allocation4]
    $region25: #{tpu_custom_call.1} parent=1 // pred_fallthru
      _
    // Predicated region
    $region26: #{tpu_custom_call.1} parent=1 // pred_check
      _
    $region27: #{tpu_custom_call.1} parent=1 // pred_check_branch
      %127 = sbr.rel (0) target = $region29
    $region28: #{tpu_custom_call.1} parent=1 // pred_region
      %129 = vsyncadd [#allocation9], 0
      %s131 = sshll.u32 [#allocation8], 4
      %s132 = int_to_ptr.vmem [resolvable:$true] %s131
      %s133 = sshll.u32 %s3, 4
      %s134 = int_to_ptr.hbm [resolvable:$true] %s133
      %136 = dma.vmem_to_hbm [thread:$0]  %s132, 128, %s134, [#allocation9]
    $region29: #{tpu_custom_call.1} parent=1 // pred_fallthru
      _
    // Predicated region
    $region30: #{tpu_custom_call.1} parent=1 // pred_check
      _
    $region31: #{tpu_custom_call.1} parent=1 // pred_check_branch
      %138 = sbr.rel (0) target = $region33
    $region32: #{tpu_custom_call.1} parent=1 // pred_region
      %140 = vsyncadd [#allocation9], 0
      %s142 = sshll.u32 [#allocation10], 4
      %s143 = int_to_ptr.vmem [resolvable:$true] %s142
      %s144 = sshll.u32 %s4, 4
      %s145 = int_to_ptr.hbm [resolvable:$true] %s144
      %147 = dma.vmem_to_hbm [thread:$0]  %s143, 128, %s145, [#allocation9]
    $region33: #{tpu_custom_call.1} parent=1 // pred_fallthru
      _
    // Predicated region
    $region34: #{tpu_custom_call.1} parent=1 // pred_check
      _
    $region35: #{tpu_custom_call.1} parent=1 // pred_check_branch
      %149 = sbr.rel (0) target = $region37
    $region36: #{tpu_custom_call.1} parent=1 // pred_region
      %151 = dma.done [#allocation4], 128
    $region37: #{tpu_custom_call.1} parent=1 // pred_fallthru
      _
    // Predicated region
    $region38: #{tpu_custom_call.1} parent=1 // pred_check
      _
    $region39: #{tpu_custom_call.1} parent=1 // pred_check_branch
      %153 = sbr.rel (0) target = $region41
    $region40: #{tpu_custom_call.1} parent=1 // pred_region
      %155 = dma.done [#allocation9], 128
    $region41: #{tpu_custom_call.1} parent=1 // pred_fallthru
      _
    // Predicated region
    $region42: #{tpu_custom_call.1} parent=1 // pred_check
      _
    $region43: #{tpu_custom_call.1} parent=1 // pred_check_branch
      %157 = sbr.rel (0) target = $region45
    $region44: #{tpu_custom_call.1} parent=1 // pred_region
      %159 = dma.done [#allocation9], 128
    $region45: #{tpu_custom_call.1} parent=1 // pred_fallthru
      _
    %160 = vsyncpa [#allocation3], 1
    %161 = vsyncpa [#allocation6], 1
    %162 = vsyncpa [#allocation4], 1
    %163 = vsyncpa [#allocation9], 1

</llo_original>
